<compile_context>
chip_gen: v7x
topology: tpu7x:2x2x1
jax: 0.10.0
libtpu: 0.0.40
codegen_flags: <defaults>
</compile_context>

<pallas_src>
import jax
import jax.numpy as jnp
from jax.experimental import pallas as pl
from jax.experimental.pallas import tpu as pltpu  # noqa: F401  (TPU backend)

_LANE = 128  # pad batch axis to the lane width for unmasked, lane-dense I/O


def _mlp_kernel(x_ref, w1_ref, b1_ref, w2t_ref, b2_ref, o_ref):
    """Lane-dense MLP forward (batch on the 128-lane axis).

    Shapes:
      x_ref:   (F, Np)   features on sublanes, padded batch on lanes
      w1_ref:  (H, F)    hidden weight in PyTorch (out, in) layout
      b1_ref:  (H, 1)
      w2t_ref: (H, O)    predict weight pre-transposed to (in, out)
      b2_ref:  (O, 1)
      o_ref:   (O, Np)
    """
    x = x_ref[...]                      # (F, Np)
    w1 = w1_ref[...]                    # (H, F)
    n_feature = x.shape[0]

    # hidden = relu(W1 @ x + b1).  With K = n_feature = 1 this is a pure VPU
    # broadcast multiply -> avoids a wasteful MXU push/pop for a 1-deep matmul.
    if n_feature == 1:
        h = w1 * x                      # (H,1) * (1,Np) -> (H,Np)
    else:
        h = jnp.dot(w1, x, preferred_element_type=jnp.float32)
    h = jnp.maximum(h + b1_ref[...], 0.0)   # (H,Np) + (H,1), ReLU on VPU

    # out = W2 @ h + b2.  With n_output = 1 this is an elementwise multiply
    # plus a sublane (XLU) reduction -> again no MXU involvement.
    w2t = w2t_ref[...]                  # (H, O)
    n_output = w2t.shape[1]
    if n_output == 1:
        y = jnp.sum(h * w2t, axis=0, keepdims=True)        # (1, Np)
    else:
        y = jnp.einsum("ho,hn->on", w2t, h,
                       preferred_element_type=jnp.float32)  # fallback path
    y = y + b2_ref[...]                 # (O,Np) + (O,1)
    o_ref[...] = y.astype(o_ref.dtype)


@jax.jit
def net_forward(x, w_hidden, b_hidden, w_predict, b_predict):
    """Forward pass of Net: predict(relu(hidden(x))).

    Args:
      x:         (N, n_feature)           float32
      w_hidden:  (n_hidden, n_feature)    PyTorch nn.Linear layout (out, in)
      b_hidden:  (n_hidden,)
      w_predict: (n_output, n_hidden)
      b_predict: (n_output,)
    Returns:
      (N, n_output) float32
    """
    n, n_feature = x.shape
    n_output = w_predict.shape[0]

    # Lane-dense layout: batch on lanes, padded to a multiple of 128 so every
    # vector load/store is unmasked.
    n_pad = ((n + _LANE - 1) // _LANE) * _LANE
    x_t = jnp.zeros((n_feature, n_pad), jnp.float32).at[:, :n].set(x.T)

    # Tiny parameter re-layouts; fused by jit, never inside the kernel.
    w1 = w_hidden.astype(jnp.float32)              # (H, F)
    b1 = b_hidden.astype(jnp.float32)[:, None]     # (H, 1)
    w2t = w_predict.astype(jnp.float32).T          # (H, O)
    b2 = b_predict.astype(jnp.float32)[:, None]    # (O, 1)

    # Single grid point, full-array blocks (block_shape == array dims, so the
    # (8,128) divisibility rule does not apply).  No grid / pipelining: the
    # whole working set fits in a handful of vregs.
    full = lambda a: pl.BlockSpec(a.shape, lambda: (0,) * a.ndim)

    out_t = pl.pallas_call(
        _mlp_kernel,
        out_shape=jax.ShapeDtypeStruct((n_output, n_pad), jnp.float32),
        in_specs=[full(x_t), full(w1), full(b1), full(w2t), full(b2)],
        out_specs=pl.BlockSpec((n_output, n_pad), lambda: (0, 0)),
    )(x_t, w1, b1, w2t, b2)

    # Back to PyTorch convention (N, n_output); drop the lane padding.
    return out_t[:, :n].T


def _reference(x, w_hidden, b_hidden, w_predict, b_predict):
    h = jnp.maximum(x @ w_hidden.T + b_hidden, 0.0)
    return h @ w_predict.T + b_predict


if __name__ == "__main__":
    n_feature, n_hidden, n_output = 1, 10, 1
    n_samples = 100

    # Same input as the original script: x = unsqueeze(linspace(-1, 1, 100), 1)
    x = jnp.linspace(-1.0, 1.0, n_samples, dtype=jnp.float32)[:, None]  # (100, 1)

    # Deterministic parameter init (shapes follow nn.Linear (out, in) + bias).
    key = jax.random.PRNGKey(0)
    k1, k2, k3, k4 = jax.random.split(key, 4)
    bound1 = 1.0 / jnp.sqrt(jnp.float32(n_feature))
    bound2 = 1.0 / jnp.sqrt(jnp.float32(n_hidden))
    w_hidden = jax.random.uniform(k1, (n_hidden, n_feature), jnp.float32, -bound1, bound1)
    b_hidden = jax.random.uniform(k2, (n_hidden,), jnp.float32, -bound1, bound1)
    w_predict = jax.random.uniform(k3, (n_output, n_hidden), jnp.float32, -bound2, bound2)
    b_predict = jax.random.uniform(k4, (n_output,), jnp.float32, -bound2, bound2)

    out = net_forward(x, w_hidden, b_hidden, w_predict, b_predict)
    out = jax.block_until_ready(out)

    ref = _reference(x, w_hidden, b_hidden, w_predict, b_predict)
    assert out.shape == (n_samples, n_output), out.shape
    assert jnp.allclose(out, ref, atol=1e-5, rtol=1e-5), "mismatch vs reference"

    print("KERNEL_OK")
</pallas_src>

<mosaic_0001>
module attributes {stable_mosaic.version = 11 : i64} {
  func.func @_mlp_kernel(%arg0: memref<1x128xf32, #tpu.memory_space<vmem>>, %arg1: memref<10x1xf32, #tpu.memory_space<vmem>>, %arg2: memref<10x1xf32, #tpu.memory_space<vmem>>, %arg3: memref<10x1xf32, #tpu.memory_space<vmem>>, %arg4: memref<1x1xf32, #tpu.memory_space<vmem>>, %arg5: memref<1x128xf32, #tpu.memory_space<vmem>>) attributes {dimension_semantics = [], scalar_prefetch = 0 : i64, scratch_operands = 0 : i64, tpu.core_type = #tpu.core_type<tc>} {
    %c0 = arith.constant 0 : index
    %c0_0 = arith.constant 0 : index
    %0 = vector.load %arg0[%c0, %c0_0] : memref<1x128xf32, #tpu.memory_space<vmem>>, vector<1x128xf32>
    %c0_1 = arith.constant 0 : index
    %c0_2 = arith.constant 0 : index
    %1 = vector.load %arg1[%c0_1, %c0_2] : memref<10x1xf32, #tpu.memory_space<vmem>>, vector<10x1xf32>
    %2 = vector.broadcast %1 : vector<10x1xf32> to vector<10x128xf32>
    %3 = vector.broadcast %0 : vector<1x128xf32> to vector<10x128xf32>
    %4 = arith.mulf %2, %3 : vector<10x128xf32>
    %c0_3 = arith.constant 0 : index
    %c0_4 = arith.constant 0 : index
    %5 = vector.load %arg2[%c0_3, %c0_4] : memref<10x1xf32, #tpu.memory_space<vmem>>, vector<10x1xf32>
    %6 = vector.broadcast %5 : vector<10x1xf32> to vector<10x128xf32>
    %7 = arith.addf %4, %6 : vector<10x128xf32>
    %cst = arith.constant 0.000000e+00 : f32
    %8 = vector.broadcast %cst : f32 to vector<10x128xf32>
    %9 = arith.maximumf %7, %8 : vector<10x128xf32>
    %c0_5 = arith.constant 0 : index
    %c0_6 = arith.constant 0 : index
    %10 = vector.load %arg3[%c0_5, %c0_6] : memref<10x1xf32, #tpu.memory_space<vmem>>, vector<10x1xf32>
    %11 = vector.broadcast %10 : vector<10x1xf32> to vector<10x128xf32>
    %12 = arith.mulf %9, %11 : vector<10x128xf32>
    %cst_7 = arith.constant dense<0.000000e+00> : vector<128xf32>
    %13 = vector.multi_reduction <add>, %12, %cst_7 [0] : vector<10x128xf32> to vector<128xf32>
    %14 = vector.shape_cast %13 : vector<128xf32> to vector<1x128xf32>
    %c0_8 = arith.constant 0 : index
    %c0_9 = arith.constant 0 : index
    %15 = vector.load %arg4[%c0_8, %c0_9] : memref<1x1xf32, #tpu.memory_space<vmem>>, vector<1x1xf32>
    %16 = vector.broadcast %15 : vector<1x1xf32> to vector<1x128xf32>
    %17 = arith.addf %14, %16 : vector<1x128xf32>
    %c0_10 = arith.constant 0 : index
    %c0_11 = arith.constant 0 : index
    %18 = vector.load %arg5[%c0_10, %c0_11] : memref<1x128xf32, #tpu.memory_space<vmem>>, vector<1x128xf32>
    tpu.vector_store %arg5[%c0_10, %c0_11], %17 {strides = array<i32>} : memref<1x128xf32, #tpu.memory_space<vmem>>, vector<1x128xf32>,
    return
  }
}

</mosaic_0001>

<llo_original>
// kernel: net_forward.1
$region0: #{net_forward.1}
  #allocation0 [shape = 'u32[]', space=smem, size = 0x4, offset = 0x4, fixed_abs, tag = 'smem constant byte address 0x4 - core index']
  #allocation1 [shape = 'u32[144,128]{1,0:T(1,128)}', space=vmem, size = 0x12000, scoped, tag = 'internal scratch']
  #allocation2 [shape = 'f32[1,1]{1,0:T(1,128)S(1)}', space=vmem, size = 0x200, scoped, tag = 'scoped memory for net_forward.1']
  %s0 = inlined_call_operand.vmem [shape: f32[1,128], index: 0, kind: input, shape index: {}]
  %s1 = inlined_call_operand.vmem [shape: f32[10,1], index: 1, kind: input, shape index: {}]
  %s2 = inlined_call_operand.vmem [shape: f32[10,1], index: 2, kind: input, shape index: {}]
  %s3 = inlined_call_operand.vmem [shape: f32[10,1], index: 3, kind: input, shape index: {}]
  %s4 = inlined_call_operand.<no memory space> [shape: f32[1,1], index: 4, kind: input, shape index: {}]
  %s5 = inlined_call_operand.vmem [shape: f32[1,128], index: 5, kind: output, shape index: {}]
  %s6 = sld [smem:[#allocation0]]
  $region30: #{net_forward.1} parent=0
    _
  %s8 = ssub.s32 1, %s6
  %s9 = scalar_select 0, %s8, %s6
  %v10 = vstv %s4
  %11 = vst [vmem:[#allocation2] sm:$0x1] %v10
  // Predicated region
  $region2: #{net_forward.1} parent=0 // pred_check
    _
  $region3: #{net_forward.1} parent=0 // pred_check_branch
    %13 = sbr.rel (0) target = $region5
  $region4: #{net_forward.1} parent=0 // pred_region
    _
  $region5: #{net_forward.1} parent=0 // pred_fallthru
    _
  // Predicated region
  $region6: #{net_forward.1} parent=0 // pred_check
    _
  $region7: #{net_forward.1} parent=0 // pred_check_branch
    %15 = sbr.rel (0) target = $region9
  $region8: #{net_forward.1} parent=0 // pred_region
    _
  $region9: #{net_forward.1} parent=0 // pred_fallthru
    _
  // Predicated region
  $region10: #{net_forward.1} parent=0 // pred_check
    _
  $region11: #{net_forward.1} parent=0 // pred_check_branch
    %17 = sbr.rel (0) target = $region13
  $region12: #{net_forward.1} parent=0 // pred_region
    _
  $region13: #{net_forward.1} parent=0 // pred_fallthru
    _
  // Predicated region
  $region14: #{net_forward.1} parent=0 // pred_check
    _
  $region15: #{net_forward.1} parent=0 // pred_check_branch
    %19 = sbr.rel (0) target = $region17
  $region16: #{net_forward.1} parent=0 // pred_region
    _
  $region17: #{net_forward.1} parent=0 // pred_fallthru
    _
  // Predicated region
  $region18: #{net_forward.1} parent=0 // pred_check
    _
  $region19: #{net_forward.1} parent=0 // pred_check_branch
    %21 = sbr.rel (0) target = $region21
  $region20: #{net_forward.1} parent=0 // pred_region
    _
  $region21: #{net_forward.1} parent=0 // pred_fallthru
    _
  %v22 = vld [vmem:[%s0] sm:$0x1]
  %v23 = vld [vmem:[%s1] sm:$0xff]
  %v24 = vld [vmem:[%s1 + $0x8] sm:$0x3]
  %26 = vset.pattern.permute.xlu0 0
  %27 = vperm.xlu0 %26, %v23
  %v28 = vpop.permute.xlu0 %27
  %31 = vset.pattern.permute.xlu0 0
  %32 = vperm.xlu0 %31, %v24
  %v33 = vpop.permute.xlu0 %32
  %v36 = vlaneseq
  %v37 = vshrl.u32 %v36, 7
  %v38 = vsub.s32 0, %v37
  %v39 = vrot.slane %v22, %v38
  %v41 = vmul.f32 %v28, %v39
  %v42 = vmul.f32 %v33, %v39
  %v43 = vld [vmem:[%s2] sm:$0xff]
  %v44 = vld [vmem:[%s2 + $0x8] sm:$0x3]
  %46 = vset.pattern.permute.xlu0 0
  %47 = vperm.xlu0 %46, %v43
  %v48 = vpop.permute.xlu0 %47
  %51 = vset.pattern.permute.xlu0 0
  %52 = vperm.xlu0 %51, %v44
  %v53 = vpop.permute.xlu0 %52
  %v55 = vadd.f32 %v41, %v48
  %v56 = vadd.f32 %v42, %v53
  %v57 = vmax.f32 %v55, 0.0
  %v58 = vmax.f32 %v56, 0.0
  %v59 = vld [vmem:[%s3] sm:$0xff]
  %v60 = vld [vmem:[%s3 + $0x8] sm:$0x3]
  %62 = vset.pattern.permute.xlu0 0
  %63 = vperm.xlu0 %62, %v59
  %v64 = vpop.permute.xlu0 %63
  %67 = vset.pattern.permute.xlu0 0
  %68 = vperm.xlu0 %67, %v60
  %v69 = vpop.permute.xlu0 %68
  %v71 = vmul.f32 %v57, %v64
  %v72 = vmul.f32 %v58, %v69
  %vm73 = vcmask 1041408
  %v74 = vsel %vm73, %v72, 0.0
  %v75 = vadd.f32 %v71, %v74
  %v76 = vrot.slane %v75, 4
  %v77 = vadd.f32 %v75, %v76
  %v78 = vrot.slane %v77, 2
  %v79 = vadd.f32 %v77, %v78
  %v80 = vrot.slane %v79, 1
  %v81 = vadd.f32 %v79, %v80
  %v82 = vld [vmem:[#allocation2] sm:$0x1]
  %84 = vset.pattern.permute.xlu0 0
  %85 = vperm.xlu0 %84, %v82
  %v86 = vpop.permute.xlu0 %85
  %v88 = vlaneseq
  %v89 = vshrl.u32 %v88, 7
  %v90 = vsub.s32 0, %v89
  %v91 = vrot.slane %v86, %v90
  %v92 = vadd.f32 %v81, %v91
  %93 = vst [vmem:[%s5] sm:$0x1] %v92
  // Predicated region
  $region22: #{net_forward.1} parent=0 // pred_check
    _
  $region23: #{net_forward.1} parent=0 // pred_check_branch
    %95 = sbr.rel (0) target = $region25
  $region24: #{net_forward.1} parent=0 // pred_region
    _
  $region25: #{net_forward.1} parent=0 // pred_fallthru
    _
  // Predicated region
  $region26: #{net_forward.1} parent=0 // pred_check
    _
  $region27: #{net_forward.1} parent=0 // pred_check_branch
    %97 = sbr.rel (0) target = $region29
  $region28: #{net_forward.1} parent=0 // pred_region
    _
  $region29: #{net_forward.1} parent=0 // pred_fallthru
    _

</llo_original>
